<compile_context>
chip_gen: v5e
topology: v5e:2x2
jax: 0.10.0
libtpu: 0.0.40
codegen_flags: <defaults>
</compile_context>

<pallas_src>
import functools
import math

import jax
import jax.numpy as jnp
from jax.experimental import pallas as pl
from jax.experimental.pallas import tpu as pltpu


def init_conv_block_params(key, in_channels, out_channels, gain=2):
    """Raw params matching WSConv2d.__init__ semantics:
    weight ~ N(0,1) (stored HWIO), bias = 0, scale = sqrt(gain / (in_ch*3*3))."""
    k1, k2 = jax.random.split(key)
    return dict(
        w1=jax.random.normal(k1, (3, 3, in_channels, out_channels), jnp.float32),
        b1=jnp.zeros((out_channels,), jnp.float32),
        s1=float(math.sqrt(gain / (in_channels * 9))),
        w2=jax.random.normal(k2, (3, 3, out_channels, out_channels), jnp.float32),
        b2=jnp.zeros((out_channels,), jnp.float32),
        s2=float(math.sqrt(gain / (out_channels * 9))),
    )


def prepare_conv_block_params(raw):
    """Fold the WSConv scale into the weights (in f32), reshape to the
    (Cout, 9*Cin) im2col layout used in-kernel, then cast to bf16."""
    def prep_w(w, scale):
        cout = w.shape[-1]
        wf = (w * scale).transpose(3, 0, 1, 2).reshape(cout, -1)   # (Cout, 9*Cin)
        return wf.astype(jnp.bfloat16)
    return dict(
        w1=prep_w(raw["w1"], raw["s1"]),
        b1=raw["b1"].reshape(-1, 1).astype(jnp.float32),
        w2=prep_w(raw["w2"], raw["s2"]),
        b2=raw["b2"].reshape(-1, 1).astype(jnp.float32),
    )


def _padded_width(H, W):
    """Smallest padded width >= W+2 such that H*Wp is a multiple of 128 (when
    the extra junk columns are cheap) -> lane-dense output stores."""
    Wp = W + 2
    step = 128 // math.gcd(H, 128)
    Wp_aligned = -(-Wp // step) * step
    if Wp_aligned <= W + 2 + max(8, W // 2):
        return Wp_aligned
    return Wp


def _make_kernel(Cin, Cmid, H, W, Wp, use_pixelnorm, leaky_slope=0.2, eps=1e-8):
    Npix = H * Wp                 # compute lanes: H rows x padded width
    L1 = (H + 3) * Wp             # flattened-padded buffer length
    emb = Wp + 1                  # data pixel (h, w) lives at emb + h*Wp + w
    tap_offsets = tuple(kh * Wp + kw for kh in range(3) for kw in range(3))

    # Static bound checks: VMEM refs have no runtime OOB check, so tie the
    # scratch length to the max tap slice end and the embedded-data extent.
    assert Wp >= W + 2
    assert max(tap_offsets) + Npix <= L1
    assert emb + (H - 1) * Wp + W <= L1

    def layer(a_scr, w_ref, b_ref, C):
        # a_scr: (C, L1) bf16 flattened-padded activations (VMEM scratch ref).
        if C < 64:
            # Toy channel counts: materialize the (9*C, Npix) im2col matrix so
            # the single MXU dot has K = 9*C instead of 9 tiny-K dots.
            p = jnp.concatenate(
                [a_scr[:, off:off + Npix] for off in tap_offsets], axis=0)
            y = jnp.dot(w_ref[...], p, preferred_element_type=jnp.float32)
        else:
            # Real channel counts: 9 accumulating dots (K = C each); no 9x
            # activation copy through vld/vst, ~1/9 the transient VMEM.
            y = jnp.zeros((w_ref.shape[0], Npix), jnp.float32)
            for t, off in enumerate(tap_offsets):
                y = y + jnp.dot(w_ref[:, t * C:(t + 1) * C],
                                a_scr[:, off:off + Npix],
                                preferred_element_type=jnp.float32)
        y = y + b_ref[...]                                  # (Cl, 1) bcast, f32
        y = jnp.where(y > 0, y, leaky_slope * y)            # LeakyReLU(0.2)
        if use_pixelnorm:
            ms = jnp.mean(y * y, axis=0, keepdims=True)     # over channels
            y = y * jax.lax.rsqrt(ms + eps)                 # EUP rsqrt
        return y

    def kernel(x_ref, w1_ref, b1_ref, w2_ref, b2_ref, mask_ref, o_ref,
               x_scr, h_scr):
        # --- embed the raw image into the flattened-padded layout (in VMEM) --
        x_scr[...] = jnp.zeros_like(x_scr)                  # halos + pad cols
        x = x_ref[0].astype(jnp.bfloat16)                   # (Cin, H*W) bf16
        for h in range(H):                                  # static unroll
            dst = emb + h * Wp
            x_scr[:, dst:dst + W] = x[:, h * W:(h + 1) * W]

        # --- layer 1 ----------------------------------------------------------
        h1 = layer(x_scr, w1_ref, b1_ref, Cin)              # (Cmid, Npix) f32
        # Re-pad entirely in VMEM: zero junk lanes via the hoisted 0/1 mask and
        # store into the persistent layer-2 scratch.  Only the halos need
        # explicit zeroing (the data region is fully overwritten each step).
        h_scr[:, 0:emb] = jnp.zeros((Cmid, emb), jnp.bfloat16)
        h_scr[:, emb + Npix:L1] = jnp.zeros((Cmid, L1 - emb - Npix), jnp.bfloat16)
        h_scr[:, emb:emb + Npix] = (h1 * mask_ref[...]).astype(jnp.bfloat16)

        # --- layer 2 ----------------------------------------------------------
        o_ref[0] = layer(h_scr, w2_ref, b2_ref, Cmid)       # (Cout, Npix) f32

    return kernel, Npix, L1


@functools.partial(jax.jit, static_argnames=("use_pixelnorm",))
def conv_block_forward(x_nchw, params, use_pixelnorm=True):
    """ConvBlock.forward.  Input/output are NCHW f32 (PyTorch convention)."""
    B, Cin, H, W = x_nchw.shape
    Cmid = params["w1"].shape[0]
    Cout = params["w2"].shape[0]
    Wp = _padded_width(H, W)
    kernel, Npix, L1 = _make_kernel(Cin, Cmid, H, W, Wp, use_pixelnorm)

    # Free bitcast-reshape (no pad, no cast, no extra HBM pass).
    x_flat = x_nchw.reshape(B, Cin, H * W)

    # Hoisted junk-lane mask (1.0 where within-row index < W), fetched once.
    mask = (jnp.arange(Npix, dtype=jnp.int32) % Wp < W)
    mask = mask.astype(jnp.float32).reshape(1, Npix)

    flops = 2 * B * Npix * 9 * (Cin * Cmid + Cmid * Cout)
    transc = 2 * B * Npix if use_pixelnorm else 0
    bytes_accessed = (x_nchw.size * 4 + params["w1"].size * 2
                      + params["w2"].size * 2 + (Cmid + Cout) * 4
                      + mask.size * 4 + B * Cout * Npix * 4)

    # VMEM budget: actual block footprint + transient values, with headroom,
    # kept well under v7x's 64 MiB physical per-TC VMEM.
    block_bytes = (
        Cin * H * W * 4 + Cout * Npix * 4                     # in/out blocks
        + (params["w1"].size + params["w2"].size) * 2          # bf16 weights
        + (Cmid + Cout) * 4 + Npix * 4                         # biases + mask
        + (Cin + Cmid) * L1 * 2                                # scratches
        + 9 * max(Cin, Cmid) * Npix * 2                        # im2col temp
        + (Cmid + Cout) * Npix * 4 * 2)                        # f32 temps
    vmem_limit = int(min(48 * 1024 * 1024,
                         max(4 * 1024 * 1024, 4 * block_bytes)))

    out = pl.pallas_call(
        kernel,
        out_shape=jax.ShapeDtypeStruct((B, Cout, Npix), jnp.float32),
        grid_spec=pltpu.PrefetchScalarGridSpec(
            num_scalar_prefetch=0,
            grid=(B,),
            in_specs=[
                pl.BlockSpec((1, Cin, H * W), lambda b: (b, 0, 0)),
                pl.BlockSpec((Cmid, 9 * Cin), lambda b: (0, 0)),
                pl.BlockSpec((Cmid, 1), lambda b: (0, 0)),
                pl.BlockSpec((Cout, 9 * Cmid), lambda b: (0, 0)),
                pl.BlockSpec((Cout, 1), lambda b: (0, 0)),
                pl.BlockSpec((1, Npix), lambda b: (0, 0)),
            ],
            out_specs=pl.BlockSpec((1, Cout, Npix), lambda b: (b, 0, 0)),
            scratch_shapes=[
                pltpu.VMEM((Cin, L1), jnp.bfloat16),    # padded layer-1 input
                pltpu.VMEM((Cmid, L1), jnp.bfloat16),   # padded layer-2 input
            ],
        ),
        compiler_params=pltpu.CompilerParams(
            dimension_semantics=("parallel",),
            vmem_limit_bytes=vmem_limit),
        cost_estimate=pl.CostEstimate(
            flops=flops, transcendentals=transc, bytes_accessed=bytes_accessed),
    )(x_flat, params["w1"], params["b1"], params["w2"], params["b2"], mask)

    # (B, Cout, H*Wp) -> (B, Cout, H, Wp) -> drop padded-width columns.
    # TODO(synk): for W >= 128 store (B, Cout, H, W) directly from the kernel
    # (lane-dense per-row stores) to delete this extra output-sized HBM pass.
    return out.reshape(B, Cout, H, Wp)[:, :, :, :W]


def _reference_forward(x_nchw, raw, use_pixelnorm=True, eps=1e-8):
    """Pure-JAX f32 reference (lax.conv) for the sanity check."""
    def layer(x, w, b, scale):
        y = jax.lax.conv_general_dilated(
            x * scale, w, window_strides=(1, 1), padding="SAME",
            dimension_numbers=("NCHW", "HWIO", "NCHW"))
        y = y + b.reshape(1, -1, 1, 1)
        y = jnp.where(y > 0, y, 0.2 * y)
        if use_pixelnorm:
            y = y / jnp.sqrt(jnp.mean(y * y, axis=1, keepdims=True) + eps)
        return y
    x = layer(x_nchw, raw["w1"], raw["b1"], raw["s1"])
    x = layer(x, raw["w2"], raw["b2"], raw["s2"])
    return x


if __name__ == "__main__":
    key = jax.random.PRNGKey(0)
    k_x, k_p = jax.random.split(key)

    B, Cin, H, W = 2, 4, 16, 16
    Cout = 8
    x = jax.random.normal(k_x, (B, Cin, H, W), jnp.float32)
    raw = init_conv_block_params(k_p, Cin, Cout)
    params = prepare_conv_block_params(raw)

    out = conv_block_forward(x, params, use_pixelnorm=True)
    out = jax.block_until_ready(out)
    assert out.shape == (B, Cout, H, W), out.shape

    ref = jax.block_until_ready(_reference_forward(x, raw))
    # bf16 MXU inputs / bf16 inter-layer activation (f32 accumulation & post-ops)
    # -> slightly looser tolerance than pure f32.
    assert jnp.allclose(out, ref, atol=5e-2, rtol=5e-2), \
        float(jnp.max(jnp.abs(out - ref)))

    print("KERNEL_OK")
</pallas_src>

<mosaic_0001>
module attributes {stable_mosaic.version = 11 : i64} {
  func.func @kernel(%arg0: i32, %arg1: memref<1x4x256xf32, #tpu.memory_space<vmem>>, %arg2: memref<8x36xbf16, #tpu.memory_space<vmem>>, %arg3: memref<8x1xf32, #tpu.memory_space<vmem>>, %arg4: memref<8x72xbf16, #tpu.memory_space<vmem>>, %arg5: memref<8x1xf32, #tpu.memory_space<vmem>>, %arg6: memref<1x384xf32, #tpu.memory_space<vmem>>, %arg7: memref<1x8x384xf32, #tpu.memory_space<vmem>>, %arg8: memref<4x456xbf16, #tpu.memory_space<vmem>>, %arg9: memref<8x456xbf16, #tpu.memory_space<vmem>>) attributes {dimension_semantics = [#tpu.dimension_semantics<parallel>], iteration_bounds = array<i64: 2>, scalar_prefetch = 0 : i64, scratch_operands = 2 : i64, tpu.core_type = #tpu.core_type<tc>, window_params = [{transform_indices = @transform_0, window_bounds = array<i64: 1, 4, 256>}, {pipeline_mode = #tpu.pipeline_mode<synchronous>, transform_indices = @transform_1, window_bounds = array<i64: 8, 36>}, {pipeline_mode = #tpu.pipeline_mode<synchronous>, transform_indices = @transform_2, window_bounds = array<i64: 8, 1>}, {pipeline_mode = #tpu.pipeline_mode<synchronous>, transform_indices = @transform_3, window_bounds = array<i64: 8, 72>}, {pipeline_mode = #tpu.pipeline_mode<synchronous>, transform_indices = @transform_4, window_bounds = array<i64: 8, 1>}, {pipeline_mode = #tpu.pipeline_mode<synchronous>, transform_indices = @transform_5, window_bounds = array<i64: 1, 384>}, {transform_indices = @transform_6, window_bounds = array<i64: 1, 8, 384>}]} {
    %cst = arith.constant 0.000000e+00 : bf16
    %0 = vector.broadcast %cst : bf16 to vector<4x456xbf16>
    %c0 = arith.constant 0 : index
    %c0_0 = arith.constant 0 : index
    %1 = vector.load %arg8[%c0, %c0_0] : memref<4x456xbf16, #tpu.memory_space<vmem>>, vector<4x456xbf16>
    tpu.vector_store %arg8[%c0, %c0_0], %0 {strides = array<i32>} : memref<4x456xbf16, #tpu.memory_space<vmem>>, vector<4x456xbf16>,
    %c0_1 = arith.constant 0 : index
    %c0_2 = arith.constant 0 : index
    %c0_3 = arith.constant 0 : index
    %2 = vector.load %arg1[%c0_1, %c0_2, %c0_3] : memref<1x4x256xf32, #tpu.memory_space<vmem>>, vector<1x4x256xf32>
    %3 = vector.shape_cast %2 : vector<1x4x256xf32> to vector<4x256xf32>
    %4 = arith.truncf %3 : vector<4x256xf32> to vector<4x256xbf16>
    %5 = vector.extract_strided_slice %4 {offsets = [0, 0], sizes = [4, 16], strides = [1, 1]} : vector<4x256xbf16> to vector<4x16xbf16>
    %c0_4 = arith.constant 0 : index
    %c25 = arith.constant 25 : index
    %6 = vector.load %arg8[%c0_4, %c25] : memref<4x456xbf16, #tpu.memory_space<vmem>>, vector<4x16xbf16>
    tpu.vector_store %arg8[%c0_4, %c25], %5 {strides = array<i32>} : memref<4x456xbf16, #tpu.memory_space<vmem>>, vector<4x16xbf16>,
    %7 = vector.extract_strided_slice %4 {offsets = [0, 16], sizes = [4, 16], strides = [1, 1]} : vector<4x256xbf16> to vector<4x16xbf16>
    %c0_5 = arith.constant 0 : index
    %c49 = arith.constant 49 : index
    %8 = vector.load %arg8[%c0_5, %c49] : memref<4x456xbf16, #tpu.memory_space<vmem>>, vector<4x16xbf16>
    tpu.vector_store %arg8[%c0_5, %c49], %7 {strides = array<i32>} : memref<4x456xbf16, #tpu.memory_space<vmem>>, vector<4x16xbf16>,
    %9 = vector.extract_strided_slice %4 {offsets = [0, 32], sizes = [4, 16], strides = [1, 1]} : vector<4x256xbf16> to vector<4x16xbf16>
    %c0_6 = arith.constant 0 : index
    %c73 = arith.constant 73 : index
    %10 = vector.load %arg8[%c0_6, %c73] : memref<4x456xbf16, #tpu.memory_space<vmem>>, vector<4x16xbf16>
    tpu.vector_store %arg8[%c0_6, %c73], %9 {strides = array<i32>} : memref<4x456xbf16, #tpu.memory_space<vmem>>, vector<4x16xbf16>,
    %11 = vector.extract_strided_slice %4 {offsets = [0, 48], sizes = [4, 16], strides = [1, 1]} : vector<4x256xbf16> to vector<4x16xbf16>
    %c0_7 = arith.constant 0 : index
    %c97 = arith.constant 97 : index
    %12 = vector.load %arg8[%c0_7, %c97] : memref<4x456xbf16, #tpu.memory_space<vmem>>, vector<4x16xbf16>
    tpu.vector_store %arg8[%c0_7, %c97], %11 {strides = array<i32>} : memref<4x456xbf16, #tpu.memory_space<vmem>>, vector<4x16xbf16>,
    %13 = vector.extract_strided_slice %4 {offsets = [0, 64], sizes = [4, 16], strides = [1, 1]} : vector<4x256xbf16> to vector<4x16xbf16>
    %c0_8 = arith.constant 0 : index
    %c121 = arith.constant 121 : index
    %14 = vector.load %arg8[%c0_8, %c121] : memref<4x456xbf16, #tpu.memory_space<vmem>>, vector<4x16xbf16>
    tpu.vector_store %arg8[%c0_8, %c121], %13 {strides = array<i32>} : memref<4x456xbf16, #tpu.memory_space<vmem>>, vector<4x16xbf16>,
    %15 = vector.extract_strided_slice %4 {offsets = [0, 80], sizes = [4, 16], strides = [1, 1]} : vector<4x256xbf16> to vector<4x16xbf16>
    %c0_9 = arith.constant 0 : index
    %c145 = arith.constant 145 : index
    %16 = vector.load %arg8[%c0_9, %c145] : memref<4x456xbf16, #tpu.memory_space<vmem>>, vector<4x16xbf16>
    tpu.vector_store %arg8[%c0_9, %c145], %15 {strides = array<i32>} : memref<4x456xbf16, #tpu.memory_space<vmem>>, vector<4x16xbf16>,
    %17 = vector.extract_strided_slice %4 {offsets = [0, 96], sizes = [4, 16], strides = [1, 1]} : vector<4x256xbf16> to vector<4x16xbf16>
    %c0_10 = arith.constant 0 : index
    %c169 = arith.constant 169 : index
    %18 = vector.load %arg8[%c0_10, %c169] : memref<4x456xbf16, #tpu.memory_space<vmem>>, vector<4x16xbf16>
    tpu.vector_store %arg8[%c0_10, %c169], %17 {strides = array<i32>} : memref<4x456xbf16, #tpu.memory_space<vmem>>, vector<4x16xbf16>,
    %19 = vector.extract_strided_slice %4 {offsets = [0, 112], sizes = [4, 16], strides = [1, 1]} : vector<4x256xbf16> to vector<4x16xbf16>
    %c0_11 = arith.constant 0 : index
    %c193 = arith.constant 193 : index
    %20 = vector.load %arg8[%c0_11, %c193] : memref<4x456xbf16, #tpu.memory_space<vmem>>, vector<4x16xbf16>
    tpu.vector_store %arg8[%c0_11, %c193], %19 {strides = array<i32>} : memref<4x456xbf16, #tpu.memory_space<vmem>>, vector<4x16xbf16>,
    %21 = vector.extract_strided_slice %4 {offsets = [0, 128], sizes = [4, 16], strides = [1, 1]} : vector<4x256xbf16> to vector<4x16xbf16>
    %c0_12 = arith.constant 0 : index
    %c217 = arith.constant 217 : index
    %22 = vector.load %arg8[%c0_12, %c217] : memref<4x456xbf16, #tpu.memory_space<vmem>>, vector<4x16xbf16>
    tpu.vector_store %arg8[%c0_12, %c217], %21 {strides = array<i32>} : memref<4x456xbf16, #tpu.memory_space<vmem>>, vector<4x16xbf16>,
    %23 = vector.extract_strided_slice %4 {offsets = [0, 144], sizes = [4, 16], strides = [1, 1]} : vector<4x256xbf16> to vector<4x16xbf16>
    %c0_13 = arith.constant 0 : index
    %c241 = arith.constant 241 : index
    %24 = vector.load %arg8[%c0_13, %c241] : memref<4x456xbf16, #tpu.memory_space<vmem>>, vector<4x16xbf16>
    tpu.vector_store %arg8[%c0_13, %c241], %23 {strides = array<i32>} : memref<4x456xbf16, #tpu.memory_space<vmem>>, vector<4x16xbf16>,
    %25 = vector.extract_strided_slice %4 {offsets = [0, 160], sizes = [4, 16], strides = [1, 1]} : vector<4x256xbf16> to vector<4x16xbf16>
    %c0_14 = arith.constant 0 : index
    %c265 = arith.constant 265 : index
    %26 = vector.load %arg8[%c0_14, %c265] : memref<4x456xbf16, #tpu.memory_space<vmem>>, vector<4x16xbf16>
    tpu.vector_store %arg8[%c0_14, %c265], %25 {strides = array<i32>} : memref<4x456xbf16, #tpu.memory_space<vmem>>, vector<4x16xbf16>,
    %27 = vector.extract_strided_slice %4 {offsets = [0, 176], sizes = [4, 16], strides = [1, 1]} : vector<4x256xbf16> to vector<4x16xbf16>
    %c0_15 = arith.constant 0 : index
    %c289 = arith.constant 289 : index
    %28 = vector.load %arg8[%c0_15, %c289] : memref<4x456xbf16, #tpu.memory_space<vmem>>, vector<4x16xbf16>
    tpu.vector_store %arg8[%c0_15, %c289], %27 {strides = array<i32>} : memref<4x456xbf16, #tpu.memory_space<vmem>>, vector<4x16xbf16>,
    %29 = vector.extract_strided_slice %4 {offsets = [0, 192], sizes = [4, 16], strides = [1, 1]} : vector<4x256xbf16> to vector<4x16xbf16>
    %c0_16 = arith.constant 0 : index
    %c313 = arith.constant 313 : index
    %30 = vector.load %arg8[%c0_16, %c313] : memref<4x456xbf16, #tpu.memory_space<vmem>>, vector<4x16xbf16>
    tpu.vector_store %arg8[%c0_16, %c313], %29 {strides = array<i32>} : memref<4x456xbf16, #tpu.memory_space<vmem>>, vector<4x16xbf16>,
    %31 = vector.extract_strided_slice %4 {offsets = [0, 208], sizes = [4, 16], strides = [1, 1]} : vector<4x256xbf16> to vector<4x16xbf16>
    %c0_17 = arith.constant 0 : index
    %c337 = arith.constant 337 : index
    %32 = vector.load %arg8[%c0_17, %c337] : memref<4x456xbf16, #tpu.memory_space<vmem>>, vector<4x16xbf16>
    tpu.vector_store %arg8[%c0_17, %c337], %31 {strides = array<i32>} : memref<4x456xbf16, #tpu.memory_space<vmem>>, vector<4x16xbf16>,
    %33 = vector.extract_strided_slice %4 {offsets = [0, 224], sizes = [4, 16], strides = [1, 1]} : vector<4x256xbf16> to vector<4x16xbf16>
    %c0_18 = arith.constant 0 : index
    %c361 = arith.constant 361 : index
    %34 = vector.load %arg8[%c0_18, %c361] : memref<4x456xbf16, #tpu.memory_space<vmem>>, vector<4x16xbf16>
    tpu.vector_store %arg8[%c0_18, %c361], %33 {strides = array<i32>} : memref<4x456xbf16, #tpu.memory_space<vmem>>, vector<4x16xbf16>,
    %35 = vector.extract_strided_slice %4 {offsets = [0, 240], sizes = [4, 16], strides = [1, 1]} : vector<4x256xbf16> to vector<4x16xbf16>
    %c0_19 = arith.constant 0 : index
    %c385 = arith.constant 385 : index
    %36 = vector.load %arg8[%c0_19, %c385] : memref<4x456xbf16, #tpu.memory_space<vmem>>, vector<4x16xbf16>
    tpu.vector_store %arg8[%c0_19, %c385], %35 {strides = array<i32>} : memref<4x456xbf16, #tpu.memory_space<vmem>>, vector<4x16xbf16>,
    %c0_20 = arith.constant 0 : index
    %c0_21 = arith.constant 0 : index
    %37 = vector.load %arg8[%c0_20, %c0_21] : memref<4x456xbf16, #tpu.memory_space<vmem>>, vector<4x384xbf16>
    %c0_22 = arith.constant 0 : index
    %c1 = arith.constant 1 : index
    %38 = vector.load %arg8[%c0_22, %c1] : memref<4x456xbf16, #tpu.memory_space<vmem>>, vector<4x384xbf16>
    %c0_23 = arith.constant 0 : index
    %c2 = arith.constant 2 : index
    %39 = vector.load %arg8[%c0_23, %c2] : memref<4x456xbf16, #tpu.memory_space<vmem>>, vector<4x384xbf16>
    %c0_24 = arith.constant 0 : index
    %c24 = arith.constant 24 : index
    %40 = vector.load %arg8[%c0_24, %c24] : memref<4x456xbf16, #tpu.memory_space<vmem>>, vector<4x384xbf16>
    %c0_25 = arith.constant 0 : index
    %c25_26 = arith.constant 25 : index
    %41 = vector.load %arg8[%c0_25, %c25_26] : memref<4x456xbf16, #tpu.memory_space<vmem>>, vector<4x384xbf16>
    %c0_27 = arith.constant 0 : index
    %c26 = arith.constant 26 : index
    %42 = vector.load %arg8[%c0_27, %c26] : memref<4x456xbf16, #tpu.memory_space<vmem>>, vector<4x384xbf16>
    %c0_28 = arith.constant 0 : index
    %c48 = arith.constant 48 : index
    %43 = vector.load %arg8[%c0_28, %c48] : memref<4x456xbf16, #tpu.memory_space<vmem>>, vector<4x384xbf16>
    %c0_29 = arith.constant 0 : index
    %c49_30 = arith.constant 49 : index
    %44 = vector.load %arg8[%c0_29, %c49_30] : memref<4x456xbf16, #tpu.memory_space<vmem>>, vector<4x384xbf16>
    %c0_31 = arith.constant 0 : index
    %c50 = arith.constant 50 : index
    %45 = vector.load %arg8[%c0_31, %c50] : memref<4x456xbf16, #tpu.memory_space<vmem>>, vector<4x384xbf16>
    %46 = tpu.concatenate %37, %38, %39, %40, %41, %42, %43, %44, %45 in 0 : vector<4x384xbf16>, vector<4x384xbf16>, vector<4x384xbf16>, vector<4x384xbf16>, vector<4x384xbf16>, vector<4x384xbf16>, vector<4x384xbf16>, vector<4x384xbf16>, vector<4x384xbf16> -> vector<36x384xbf16>
    %c0_32 = arith.constant 0 : index
    %c0_33 = arith.constant 0 : index
    %47 = vector.load %arg2[%c0_32, %c0_33] : memref<8x36xbf16, #tpu.memory_space<vmem>>, vector<8x36xbf16>
    %cst_34 = arith.constant dense<0.000000e+00> : vector<8x384xf32>
    %48 = tpu.matmul %47, %46, %cst_34 {dimension_numbers = #tpu.dot_dimension_numbers<[1], [0], [0], [1], [0, 0, 1, 1], [], []>} : vector<8x36xbf16>, vector<36x384xbf16>, vector<8x384xf32> -> vector<8x384xf32>
    %c0_35 = arith.constant 0 : index
    %c0_36 = arith.constant 0 : index
    %49 = vector.load %arg3[%c0_35, %c0_36] : memref<8x1xf32, #tpu.memory_space<vmem>>, vector<8x1xf32>
    %50 = vector.broadcast %49 : vector<8x1xf32> to vector<8x384xf32>
    %51 = arith.addf %48, %50 : vector<8x384xf32>
    %cst_37 = arith.constant 0.000000e+00 : f32
    %52 = vector.broadcast %cst_37 : f32 to vector<8x384xf32>
    %53 = arith.cmpf ogt, %51, %52 : vector<8x384xf32>
    %cst_38 = arith.constant 2.000000e-01 : f32
    %54 = vector.broadcast %cst_38 : f32 to vector<8x384xf32>
    %55 = arith.mulf %54, %51 : vector<8x384xf32>
    %56 = arith.select %53, %51, %55 : vector<8x384xi1>, vector<8x384xf32>
    %57 = arith.mulf %56, %56 : vector<8x384xf32>
    %cst_39 = arith.constant dense<0.000000e+00> : vector<384xf32>
    %58 = vector.multi_reduction <add>, %57, %cst_39 [0] : vector<8x384xf32> to vector<384xf32>
    %59 = vector.shape_cast %58 : vector<384xf32> to vector<1x384xf32>
    %cst_40 = arith.constant 8.000000e+00 : f32
    %60 = vector.broadcast %cst_40 : f32 to vector<1x384xf32>
    %61 = arith.divf %59, %60 : vector<1x384xf32>
    %cst_41 = arith.constant 9.99999993E-9 : f32
    %62 = vector.broadcast %cst_41 : f32 to vector<1x384xf32>
    %63 = arith.addf %61, %62 : vector<1x384xf32>
    %64 = math.rsqrt %63 : vector<1x384xf32>
    %65 = vector.broadcast %64 : vector<1x384xf32> to vector<8x384xf32>
    %66 = arith.mulf %56, %65 : vector<8x384xf32>
    %cst_42 = arith.constant 0.000000e+00 : bf16
    %67 = vector.broadcast %cst_42 : bf16 to vector<8x25xbf16>
    %c0_43 = arith.constant 0 : index
    %c0_44 = arith.constant 0 : index
    %68 = vector.load %arg9[%c0_43, %c0_44] : memref<8x456xbf16, #tpu.memory_space<vmem>>, vector<8x25xbf16>
    tpu.vector_store %arg9[%c0_43, %c0_44], %67 {strides = array<i32>} : memref<8x456xbf16, #tpu.memory_space<vmem>>, vector<8x25xbf16>,
    %cst_45 = arith.constant 0.000000e+00 : bf16
    %69 = vector.broadcast %cst_45 : bf16 to vector<8x47xbf16>
    %c0_46 = arith.constant 0 : index
    %c409 = arith.constant 409 : index
    %70 = vector.load %arg9[%c0_46, %c409] : memref<8x456xbf16, #tpu.memory_space<vmem>>, vector<8x47xbf16>
    tpu.vector_store %arg9[%c0_46, %c409], %69 {strides = array<i32>} : memref<8x456xbf16, #tpu.memory_space<vmem>>, vector<8x47xbf16>,
    %c0_47 = arith.constant 0 : index
    %c0_48 = arith.constant 0 : index
    %71 = vector.load %arg6[%c0_47, %c0_48] : memref<1x384xf32, #tpu.memory_space<vmem>>, vector<1x384xf32>
    %72 = vector.broadcast %71 : vector<1x384xf32> to vector<8x384xf32>
    %73 = arith.mulf %66, %72 : vector<8x384xf32>
    %74 = arith.truncf %73 : vector<8x384xf32> to vector<8x384xbf16>
    %c0_49 = arith.constant 0 : index
    %c25_50 = arith.constant 25 : index
    %75 = vector.load %arg9[%c0_49, %c25_50] : memref<8x456xbf16, #tpu.memory_space<vmem>>, vector<8x384xbf16>
    tpu.vector_store %arg9[%c0_49, %c25_50], %74 {strides = array<i32>} : memref<8x456xbf16, #tpu.memory_space<vmem>>, vector<8x384xbf16>,
    %c0_51 = arith.constant 0 : index
    %c0_52 = arith.constant 0 : index
    %76 = vector.load %arg9[%c0_51, %c0_52] : memref<8x456xbf16, #tpu.memory_space<vmem>>, vector<8x384xbf16>
    %c0_53 = arith.constant 0 : index
    %c1_54 = arith.constant 1 : index
    %77 = vector.load %arg9[%c0_53, %c1_54] : memref<8x456xbf16, #tpu.memory_space<vmem>>, vector<8x384xbf16>
    %c0_55 = arith.constant 0 : index
    %c2_56 = arith.constant 2 : index
    %78 = vector.load %arg9[%c0_55, %c2_56] : memref<8x456xbf16, #tpu.memory_space<vmem>>, vector<8x384xbf16>
    %c0_57 = arith.constant 0 : index
    %c24_58 = arith.constant 24 : index
    %79 = vector.load %arg9[%c0_57, %c24_58] : memref<8x456xbf16, #tpu.memory_space<vmem>>, vector<8x384xbf16>
    %c0_59 = arith.constant 0 : index
    %c25_60 = arith.constant 25 : index
    %80 = vector.load %arg9[%c0_59, %c25_60] : memref<8x456xbf16, #tpu.memory_space<vmem>>, vector<8x384xbf16>
    %c0_61 = arith.constant 0 : index
    %c26_62 = arith.constant 26 : index
    %81 = vector.load %arg9[%c0_61, %c26_62] : memref<8x456xbf16, #tpu.memory_space<vmem>>, vector<8x384xbf16>
    %c0_63 = arith.constant 0 : index
    %c48_64 = arith.constant 48 : index
    %82 = vector.load %arg9[%c0_63, %c48_64] : memref<8x456xbf16, #tpu.memory_space<vmem>>, vector<8x384xbf16>
    %c0_65 = arith.constant 0 : index
    %c49_66 = arith.constant 49 : index
    %83 = vector.load %arg9[%c0_65, %c49_66] : memref<8x456xbf16, #tpu.memory_space<vmem>>, vector<8x384xbf16>
    %c0_67 = arith.constant 0 : index
    %c50_68 = arith.constant 50 : index
    %84 = vector.load %arg9[%c0_67, %c50_68] : memref<8x456xbf16, #tpu.memory_space<vmem>>, vector<8x384xbf16>
    %85 = tpu.concatenate %76, %77, %78, %79, %80, %81, %82, %83, %84 in 0 : vector<8x384xbf16>, vector<8x384xbf16>, vector<8x384xbf16>, vector<8x384xbf16>, vector<8x384xbf16>, vector<8x384xbf16>, vector<8x384xbf16>, vector<8x384xbf16>, vector<8x384xbf16> -> vector<72x384xbf16>
    %c0_69 = arith.constant 0 : index
    %c0_70 = arith.constant 0 : index
    %86 = vector.load %arg4[%c0_69, %c0_70] : memref<8x72xbf16, #tpu.memory_space<vmem>>, vector<8x72xbf16>
    %cst_71 = arith.constant dense<0.000000e+00> : vector<8x384xf32>
    %87 = tpu.matmul %86, %85, %cst_71 {dimension_numbers = #tpu.dot_dimension_numbers<[1], [0], [0], [1], [0, 0, 1, 1], [], []>} : vector<8x72xbf16>, vector<72x384xbf16>, vector<8x384xf32> -> vector<8x384xf32>
    %c0_72 = arith.constant 0 : index
    %c0_73 = arith.constant 0 : index
    %88 = vector.load %arg5[%c0_72, %c0_73] : memref<8x1xf32, #tpu.memory_space<vmem>>, vector<8x1xf32>
    %89 = vector.broadcast %88 : vector<8x1xf32> to vector<8x384xf32>
    %90 = arith.addf %87, %89 : vector<8x384xf32>
    %cst_74 = arith.constant 0.000000e+00 : f32
    %91 = vector.broadcast %cst_74 : f32 to vector<8x384xf32>
    %92 = arith.cmpf ogt, %90, %91 : vector<8x384xf32>
    %cst_75 = arith.constant 2.000000e-01 : f32
    %93 = vector.broadcast %cst_75 : f32 to vector<8x384xf32>
    %94 = arith.mulf %93, %90 : vector<8x384xf32>
    %95 = arith.select %92, %90, %94 : vector<8x384xi1>, vector<8x384xf32>
    %96 = arith.mulf %95, %95 : vector<8x384xf32>
    %cst_76 = arith.constant dense<0.000000e+00> : vector<384xf32>
    %97 = vector.multi_reduction <add>, %96, %cst_76 [0] : vector<8x384xf32> to vector<384xf32>
    %98 = vector.shape_cast %97 : vector<384xf32> to vector<1x384xf32>
    %cst_77 = arith.constant 8.000000e+00 : f32
    %99 = vector.broadcast %cst_77 : f32 to vector<1x384xf32>
    %100 = arith.divf %98, %99 : vector<1x384xf32>
    %cst_78 = arith.constant 9.99999993E-9 : f32
    %101 = vector.broadcast %cst_78 : f32 to vector<1x384xf32>
    %102 = arith.addf %100, %101 : vector<1x384xf32>
    %103 = math.rsqrt %102 : vector<1x384xf32>
    %104 = vector.broadcast %103 : vector<1x384xf32> to vector<8x384xf32>
    %105 = arith.mulf %95, %104 : vector<8x384xf32>
    %c0_79 = arith.constant 0 : index
    %c0_80 = arith.constant 0 : index
    %c0_81 = arith.constant 0 : index
    %106 = vector.load %arg7[%c0_79, %c0_80, %c0_81] : memref<1x8x384xf32, #tpu.memory_space<vmem>>, vector<1x8x384xf32>
    %107 = vector.shape_cast %106 : vector<1x8x384xf32> to vector<8x384xf32>
    %108 = vector.shape_cast %105 : vector<8x384xf32> to vector<1x8x384xf32>
    tpu.vector_store %arg7[%c0_79, %c0_80, %c0_81], %108 {strides = array<i32>} : memref<1x8x384xf32, #tpu.memory_space<vmem>>, vector<1x8x384xf32>,
    return
  }
  func.func @transform_0(%arg0: i32) -> (i32, i32, i32) {
    %c0_i32 = arith.constant 0 : i32
    %c0_i32_0 = arith.constant 0 : i32
    %c0_i32_1 = arith.constant 0 : i32
    return %arg0, %c0_i32, %c0_i32_0 : i32, i32, i32
  }
  func.func @transform_1(%arg0: i32) -> (i32, i32) {
    %c0_i32 = arith.constant 0 : i32
    %c0_i32_0 = arith.constant 0 : i32
    %c0_i32_1 = arith.constant 0 : i32
    return %c0_i32, %c0_i32_0 : i32, i32
  }
  func.func @transform_2(%arg0: i32) -> (i32, i32) {
    %c0_i32 = arith.constant 0 : i32
    %c0_i32_0 = arith.constant 0 : i32
    %c0_i32_1 = arith.constant 0 : i32
    return %c0_i32, %c0_i32_0 : i32, i32
  }
  func.func @transform_3(%arg0: i32) -> (i32, i32) {
    %c0_i32 = arith.constant 0 : i32
    %c0_i32_0 = arith.constant 0 : i32
    %c0_i32_1 = arith.constant 0 : i32
    return %c0_i32, %c0_i32_0 : i32, i32
  }
  func.func @transform_4(%arg0: i32) -> (i32, i32) {
    %c0_i32 = arith.constant 0 : i32
    %c0_i32_0 = arith.constant 0 : i32
    %c0_i32_1 = arith.constant 0 : i32
    return %c0_i32, %c0_i32_0 : i32, i32
  }
  func.func @transform_5(%arg0: i32) -> (i32, i32) {
    %c0_i32 = arith.constant 0 : i32
    %c0_i32_0 = arith.constant 0 : i32
    %c0_i32_1 = arith.constant 0 : i32
    return %c0_i32, %c0_i32_0 : i32, i32
  }
  func.func @transform_6(%arg0: i32) -> (i32, i32, i32) {
    %c0_i32 = arith.constant 0 : i32
    %c0_i32_0 = arith.constant 0 : i32
    %c0_i32_1 = arith.constant 0 : i32
    return %arg0, %c0_i32, %c0_i32_0 : i32, i32, i32
  }
}

</mosaic_0001>

<llo_original>
// kernel: conv_block_forward.1
$region0: #{conv_block_forward.1}
  #allocation0 [shape = 'u32[]', space=smem, size = 0x4, offset = 0x4, fixed_abs, tag = 'smem constant byte address 0x4 - core index']
  #allocation1 [shape = 'u32[72,128]{1,0:T(1,128)}', space=vmem, size = 0x9000, scoped, tag = 'internal scratch']
  #allocation2 [shape = 'bf16[4,456]{1,0:T(4,128)(2,1)}', space=vmem, size = 0x1000, scoped, tag = 'scratch operand']
  #allocation3 [shape = 'bf16[8,456]{1,0:T(8,128)(2,1)}', space=vmem, size = 0x2000, scoped, tag = 'scratch operand']
  %s0 = inlined_call_operand.vmem [shape: f32[2,4,256], index: 0, kind: input, shape index: {}]
  %s1 = inlined_call_operand.vmem [shape: bf16[8,36], index: 1, kind: input, shape index: {}]
  %s2 = inlined_call_operand.vmem [shape: f32[8,1], index: 2, kind: input, shape index: {}]
  %s3 = inlined_call_operand.vmem [shape: bf16[8,72], index: 3, kind: input, shape index: {}]
  %s4 = inlined_call_operand.vmem [shape: f32[8,1], index: 4, kind: input, shape index: {}]
  %s5 = inlined_call_operand.vmem [shape: f32[1,384], index: 5, kind: input, shape index: {}]
  %s6 = inlined_call_operand.vmem [shape: f32[2,8,384], index: 6, kind: output, shape index: {}]
  %s7 = sld [smem:[#allocation0]]
  $region57: #{conv_block_forward.1} parent=0
    _
  %s9 = ssub.s32 1, %s7
  %s10 = scalar_select 0, %s9, %s7
  loop: start=0, step=1, limit=4
  $region2: #{conv_block_forward.1} parent=0 // loop_pre_header
    _
  $region3: #{conv_block_forward.1} parent=0 // loop_header
    %s12 = sphi 0, %s16
    %p13 = scmp.ge.s32.totalorder %s12, 4
    %s22 = sphi 0, %s24
    %s25 = sphi 0, %s22
    %s26 = sphi 0, %s25
    %s42 = sphi 0, %s26
    %s46 = sphi 0, %s46
    %s48 = sphi 0, %s46
    %s49 = sphi 0, %s48
    %s63 = sphi 0, %s49
    %s67 = sphi 0, %s67
    %s69 = sphi 0, %s67
    %s70 = sphi 0, %s69
    %s84 = sphi 0, %s70
    %s88 = sphi 0, %s88
    %s90 = sphi 0, %s88
    %s91 = sphi 0, %s90
    %s105 = sphi 0, %s91
    %s109 = sphi 0, %s109
    %s111 = sphi 0, %s109
    %s112 = sphi 0, %s111
    %s126 = sphi 0, %s112
    %s130 = sphi 0, %s130
    %s132 = sphi 0, %s130
    %s133 = sphi 0, %s132
    %s147 = sphi 0, %s133
    %s153 = sphi 0, %s155
    %s156 = sphi 0, %s153
    %s157 = sphi 0, %s156
    %s173 = sphi 0, %s157
  $region4: #{conv_block_forward.1} parent=0 // loop_header_branch
    %15 = sbr.rel (%p13) target = $region8
  $region5: #{conv_block_forward.1} parent=0 // loop_body
    %s17 = ssub.s32 %s12, 1
    %s18 = ssub.s32 %s12, 2
    %s19 = sadd.s32 %s12, 1
    %s20 = ssub.s32 %s12, %s19
    %p21 = scmp.eq.s32.totalorder %s20, 0
    %s23 = sadd.s32 %s22, 1
    %s24 = scalar_select %p21, %s22, %s23
    %p27 = pneg %p21
    %p28 = scmp.eq.s32.totalorder %s12, 1
    %p29 = por %p27, %p28
    %p30 = scmp.ne.s32.totalorder %s22, %s25
    %p31 = scmp.eq.s32.totalorder %s12, 0
    %p32 = por %p30, %p31
    %p33 = scmp.ne.s32.totalorder %s22, %s25
    %p34 = scmp.eq.s32.totalorder %s17, 1
    %p35 = por %p33, %p34
    %p36 = scmp.ne.s32.totalorder %s25, %s26
    %p37 = scmp.eq.s32.totalorder %s17, 0
    %p38 = por %p36, %p37
    %p39 = scmp.ne.s32.totalorder %s25, %s26
    %p40 = scmp.eq.s32.totalorder %s18, 1
    %p41 = por %p39, %p40
    %p43 = scmp.ne.s32.totalorder %s26, %s42
    %p44 = scmp.eq.s32.totalorder %s18, 0
    %p45 = por %p43, %p44
    %s47 = sadd.s32 %s46, 1
    %p50 = scmp.eq.s32.totalorder %s12, 1
    %p51 = scmp.ne.s32.totalorder %s46, %s48
    %p52 = scmp.eq.s32.totalorder %s12, 0
    %p53 = por %p51, %p52
    %p54 = scmp.ne.s32.totalorder %s46, %s48
    %p55 = scmp.eq.s32.totalorder %s17, 1
    %p56 = por %p54, %p55
    %p57 = scmp.ne.s32.totalorder %s48, %s49
    %p58 = scmp.eq.s32.totalorder %s17, 0
    %p59 = por %p57, %p58
    %p60 = scmp.ne.s32.totalorder %s48, %s49
    %p61 = scmp.eq.s32.totalorder %s18, 1
    %p62 = por %p60, %p61
    %p64 = scmp.ne.s32.totalorder %s49, %s63
    %p65 = scmp.eq.s32.totalorder %s18, 0
    %p66 = por %p64, %p65
    %s68 = sadd.s32 %s67, 1
    %p71 = scmp.eq.s32.totalorder %s12, 1
    %p72 = scmp.ne.s32.totalorder %s67, %s69
    %p73 = scmp.eq.s32.totalorder %s12, 0
    %p74 = por %p72, %p73
    %p75 = scmp.ne.s32.totalorder %s67, %s69
    %p76 = scmp.eq.s32.totalorder %s17, 1
    %p77 = por %p75, %p76
    %p78 = scmp.ne.s32.totalorder %s69, %s70
    %p79 = scmp.eq.s32.totalorder %s17, 0
    %p80 = por %p78, %p79
    %p81 = scmp.ne.s32.totalorder %s69, %s70
    %p82 = scmp.eq.s32.totalorder %s18, 1
    %p83 = por %p81, %p82
    %p85 = scmp.ne.s32.totalorder %s70, %s84
    %p86 = scmp.eq.s32.totalorder %s18, 0
    %p87 = por %p85, %p86
    %s89 = sadd.s32 %s88, 1
    %p92 = scmp.eq.s32.totalorder %s12, 1
    %p93 = scmp.ne.s32.totalorder %s88, %s90
    %p94 = scmp.eq.s32.totalorder %s12, 0
    %p95 = por %p93, %p94
    %p96 = scmp.ne.s32.totalorder %s88, %s90
    %p97 = scmp.eq.s32.totalorder %s17, 1
    %p98 = por %p96, %p97
    %p99 = scmp.ne.s32.totalorder %s90, %s91
    %p100 = scmp.eq.s32.totalorder %s17, 0
    %p101 = por %p99, %p100
    %p102 = scmp.ne.s32.totalorder %s90, %s91
    %p103 = scmp.eq.s32.totalorder %s18, 1
    %p104 = por %p102, %p103
    %p106 = scmp.ne.s32.totalorder %s91, %s105
    %p107 = scmp.eq.s32.totalorder %s18, 0
    %p108 = por %p106, %p107
    %s110 = sadd.s32 %s109, 1
    %p113 = scmp.eq.s32.totalorder %s12, 1
    %p114 = scmp.ne.s32.totalorder %s109, %s111
    %p115 = scmp.eq.s32.totalorder %s12, 0
    %p116 = por %p114, %p115
    %p117 = scmp.ne.s32.totalorder %s109, %s111
    %p118 = scmp.eq.s32.totalorder %s17, 1
    %p119 = por %p117, %p118
    %p120 = scmp.ne.s32.totalorder %s111, %s112
    %p121 = scmp.eq.s32.totalorder %s17, 0
    %p122 = por %p120, %p121
    %p123 = scmp.ne.s32.totalorder %s111, %s112
    %p124 = scmp.eq.s32.totalorder %s18, 1
    %p125 = por %p123, %p124
    %p127 = scmp.ne.s32.totalorder %s112, %s126
    %p128 = scmp.eq.s32.totalorder %s18, 0
    %p129 = por %p127, %p128
    %s131 = sadd.s32 %s130, 1
    %p134 = scmp.eq.s32.totalorder %s12, 1
    %p135 = scmp.ne.s32.totalorder %s130, %s132
    %p136 = scmp.eq.s32.totalorder %s12, 0
    %p137 = por %p135, %p136
    %p138 = scmp.ne.s32.totalorder %s130, %s132
    %p139 = scmp.eq.s32.totalorder %s17, 1
    %p140 = por %p138, %p139
    %p141 = scmp.ne.s32.totalorder %s132, %s133
    %p142 = scmp.eq.s32.totalorder %s17, 0
    %p143 = por %p141, %p142
    %p144 = scmp.ne.s32.totalorder %s132, %s133
    %p145 = scmp.eq.s32.totalorder %s18, 1
    %p146 = por %p144, %p145
    %p148 = scmp.ne.s32.totalorder %s133, %s147
    %p149 = scmp.eq.s32.totalorder %s18, 0
    %p150 = por %p148, %p149
    %s151 = ssub.s32 %s12, %s19
    %p152 = scmp.eq.s32.totalorder %s151, 0
    %s154 = sadd.s32 %s153, 1
    %s155 = scalar_select %p152, %s153, %s154
    %p158 = pneg %p152
    %p159 = scmp.eq.s32.totalorder %s12, 1
    %p160 = por %p158, %p159
    %p161 = scmp.ne.s32.totalorder %s153, %s156
    %p162 = scmp.eq.s32.totalorder %s12, 0
    %p163 = por %p161, %p162
    %p164 = scmp.ne.s32.totalorder %s153, %s156
    %p165 = scmp.eq.s32.totalorder %s17, 1
    %p166 = por %p164, %p165
    %p167 = scmp.ne.s32.totalorder %s156, %s157
    %p168 = scmp.eq.s32.totalorder %s17, 0
    %p169 = por %p167, %p168
    %p170 = scmp.ne.s32.totalorder %s156, %s157
    %p171 = scmp.eq.s32.totalorder %s18, 1
    %p172 = por %p170, %p171
    %p174 = scmp.ne.s32.totalorder %s157, %s173
    %p175 = scmp.eq.s32.totalorder %s18, 0
    %p176 = por %p174, %p175
    %p177 = scmp.le.s32.totalorder 1, %s12
    %p178 = scmp.lt.s32.totalorder %s12, 3
    %p179 = pnand %p177, %p178
    %p180 = pneg %p179
    // Predicated region
    $region9: #{conv_block_forward.1} parent=5 // pred_check
      _
    $region10: #{conv_block_forward.1} parent=5 // pred_check_branch
      %182 = sbr.rel (%p179) target = $region12
    $region11: #{conv_block_forward.1} parent=5 // pred_region
      %s183 = ssub.s32 %s12, 1
      // Predicated region
      $region13: #{conv_block_forward.1} parent=11 // pred_check
        %p184 = pneg %p59
      $region14: #{conv_block_forward.1} parent=11 // pred_check_branch
        %186 = sbr.rel (%p184) target = $region16
      $region15: #{conv_block_forward.1} parent=11 // pred_region
        _
      $region16: #{conv_block_forward.1} parent=11 // pred_fallthru
        _
      // Predicated region
      $region17: #{conv_block_forward.1} parent=11 // pred_check
        %p187 = pneg %p80
      $region18: #{conv_block_forward.1} parent=11 // pred_check_branch
        %189 = sbr.rel (%p187) target = $region20
      $region19: #{conv_block_forward.1} parent=11 // pred_region
        _
      $region20: #{conv_block_forward.1} parent=11 // pred_fallthru
        _
      // Predicated region
      $region21: #{conv_block_forward.1} parent=11 // pred_check
        %p190 = pneg %p101
      $region22: #{conv_block_forward.1} parent=11 // pred_check_branch
        %192 = sbr.rel (%p190) target = $region24
      $region23: #{conv_block_forward.1} parent=11 // pred_region
        _
      $region24: #{conv_block_forward.1} parent=11 // pred_fallthru
        _
      // Predicated region
      $region25: #{conv_block_forward.1} parent=11 // pred_check
        %p193 = pneg %p122
      $region26: #{conv_block_forward.1} parent=11 // pred_check_branch
        %195 = sbr.rel (%p193) target = $region28
      $region27: #{conv_block_forward.1} parent=11 // pred_region
        _
      $region28: #{conv_block_forward.1} parent=11 // pred_fallthru
        _
      // Predicated region
      $region29: #{conv_block_forward.1} parent=11 // pred_check
        %p196 = pneg %p143
      $region30: #{conv_block_forward.1} parent=11 // pred_check_branch
        %198 = sbr.rel (%p196) target = $region32
      $region31: #{conv_block_forward.1} parent=11 // pred_region
        _
      $region32: #{conv_block_forward.1} parent=11 // pred_fallthru
        _
    $region12: #{conv_block_forward.1} parent=5 // pred_fallthru
      _
    %p199 = scmp.lt.s32.totalorder %s12, 2
    // Predicated region
    $region33: #{conv_block_forward.1} parent=5 // pred_check
      %p200 = pneg %p199
    $region34: #{conv_block_forward.1} parent=5 // pred_check_branch
      %202 = sbr.rel (%p200) target = $region36
    $region35: #{conv_block_forward.1} parent=5 // pred_region
      // Predicated region
      $region37: #{conv_block_forward.1} parent=35 // pred_check
        %p203 = pneg %p32
      $region38: #{conv_block_forward.1} parent=35 // pred_check_branch
        %205 = sbr.rel (%p203) target = $region40
      $region39: #{conv_block_forward.1} parent=35 // pred_region
        %p206 = scmp.lt.s32.totalorder %s12, 1
        %s207 = scalar_select %p206, %s12, 1
        %s208 = smul.addr %s207, 2
        %s209 = smul.addr %s208, 4
        %s210 = scalar_lea.vmem %s0, %s209
      $region40: #{conv_block_forward.1} parent=35 // pred_fallthru
        _
    $region36: #{conv_block_forward.1} parent=5 // pred_fallthru
      _
    %p211 = scmp.le.s32.totalorder 1, %s12
    %p212 = scmp.lt.s32.totalorder %s12, 3
    %p213 = pnand %p211, %p212
    %p214 = pneg %p213
    // Predicated region
    $region41: #{conv_block_forward.1} parent=5 // pred_check
      _
    $region42: #{conv_block_forward.1} parent=5 // pred_check_branch
      %216 = sbr.rel (%p213) target = $region44
    $region43: #{conv_block_forward.1} parent=5 // pred_region
      %s217 = ssub.s32 %s12, 1
      %p218 = scmp.lt.s32.totalorder %s17, 1
      %s219 = scalar_select %p218, %s17, 1
      %s220 = smul.addr %s219, 2
      %s221 = smul.addr %s220, 4
      %s222 = scalar_lea.vmem %s0, %s221
      %p223 = pneg %p38
      %p224 = pneg %p35
      %p225 = pneg %p59
      %p226 = pneg %p56
      %p227 = pneg %p80
      %p228 = pneg %p77
      %p229 = pneg %p101
      %p230 = pneg %p98
      %p231 = pneg %p122
      %p232 = pneg %p119
      %p233 = pneg %p143
      %p234 = pneg %p140
      %p235 = pneg %p169
      %p236 = pneg %p166
      %p237 = scmp.lt.s32.totalorder %s17, 1
      %s238 = scalar_select %p237, %s17, 1
      %s239 = smul.addr %s238, 3
      %s240 = smul.addr %s239, 8
      %s241 = scalar_lea.vmem %s6, %s240
      %p242 = scmp.lt.s32.totalorder %s17, 1
      %s243 = scalar_select %p242, %s17, 1
      %s244 = smul.addr %s243, 2
      %s245 = smul.addr %s244, 4
      %s246 = scalar_lea.vmem %s0, %s245
      %p247 = scmp.lt.s32.totalorder %s17, 1
      %s248 = scalar_select %p247, %s17, 1
      %s249 = smul.addr %s248, 3
      %s250 = smul.addr %s249, 8
      %s251 = scalar_lea.vmem %s6, %s250
      %vm253 = vcmask 1041408
      %vm254 = vcmask 1043458
      %vm255 = vmor %vm254, %vm253
      %vm256 = vcmask 1045508
      %vm257 = vmor %vm256, %vm255
      %vm258 = vcmask 588806
      %vm259 = vmor %vm258, %vm257
      %260 = vst.msk [vmem:[#allocation2] sm:$0xff] %vm259, 0
      %v261 = vld [vmem:[%s246] sm:$0xff]
      %263 = vst [vmem:[#allocation1] ss:$2 sm:$0xff] %v261
      %v264 = vld.sshfl [vmem:[#allocation1] sm:$0xff pattern:$0x75316420]
      %v265 = vld.sshfl [vmem:[#allocation1 + $0x8] sm:$0xff pattern:$0x75316420]
      %v268 = vpack.c.bf16 %v265, %v264
      %v270 = vrot.slane %v268, 2
      %v273 = vsel %vm253, %v268, %v270
      %275 = vrot.lane.b32.xlu0 %v273, 25
      %v276 = vpop.permute.xlu0 %275
      %vm278 = vcmask 328904
      %279 = vst.msk [vmem:[#allocation2] sm:$0x3] %vm278, %v276
      %280 = vrot.lane.b32.xlu0 %v273, 33
      %v281 = vpop.permute.xlu0 %280
      %vm283 = vcmask 525704
      %284 = vst.msk [vmem:[#allocation2] sm:$0x3] %vm283, %v281
      %285 = vrot.lane.b32.xlu0 %v273, 41
      %v286 = vpop.permute.xlu0 %285
      %vm288 = vcmask 722504
      %289 = vst.msk [vmem:[#allocation2] sm:$0x3] %vm288, %v286
      %290 = vrot.lane.b32.xlu0 %v273, 49
      %v291 = vpop.permute.xlu0 %290
      %vm293 = vcmask 919304
      %294 = vst.msk [vmem:[#allocation2] sm:$0x3] %vm293, %v291
      %295 = vrot.lane.b32.xlu0 %v273, 57
      %v296 = vpop.permute.xlu0 %295
      %v297 = vrot.slane %v296, 6
      %vm298 = vcmask 465920
      %v299 = vsel %vm298, %v297, %v296
      %vm301 = vcmask 1042376
      %vm302 = vcmask 68610
      %vm303 = vmor %vm302, %vm301
      %304 = vst.msk [vmem:[#allocation2] sm:$0xf] %vm303, %v299
      %305 = vrot.lane.b32.xlu0 %v273, 65
      %v306 = vpop.permute.xlu0 %305
      %vm308 = vcmask 263304
      %309 = vst.msk [vmem:[#allocation2 + $0x2] sm:$0x3] %vm308, %v306
      %310 = vrot.lane.b32.xlu0 %v273, 73
      %v311 = vpop.permute.xlu0 %310
      %vm313 = vcmask 460104
      %314 = vst.msk [vmem:[#allocation2 + $0x2] sm:$0x3] %vm313, %v311
      %315 = vrot.lane.b32.xlu0 %v273, 81
      %v316 = vpop.permute.xlu0 %315
      %vm318 = vcmask 656904
      %319 = vst.msk [vmem:[#allocation2 + $0x2] sm:$0x3] %vm318, %v316
      %320 = vrot.lane.b32.xlu0 %v273, 89
      %v321 = vpop.permute.xlu0 %320
      %v322 = vrot.slane %v321, 2
      %vm323 = vcmask 728064
      %v324 = vsel %vm323, %v321, %v322
      %vm326 = vcmask 853704
      %327 = vst.msk [vmem:[#allocation2 + $0x2] sm:$0x3] %vm326, %v324
      %328 = vrot.lane.b32.xlu0 %v273, 97
      %v329 = vpop.permute.xlu0 %328
      %v330 = vrot.slane %v329, 2
      %vm331 = vcmask 793600
      %v332 = vsel %vm331, %v329, %v330
      %vm334 = vcmask 1042312
      %vm335 = vcmask 3074
      %vm336 = vmor %vm335, %vm334
      %337 = vst.msk [vmem:[#allocation2 + $0x2] sm:$0xf] %vm336, %v332
      %338 = vrot.lane.b32.xlu0 %v273, 105
      %v339 = vpop.permute.xlu0 %338
      %v340 = vrot.slane %v339, 2
      %vm342 = vcmask 197704
      %343 = vst.msk [vmem:[#allocation2 + $0x4] sm:$0x3] %vm342, %v340
      %344 = vrot.lane.b32.xlu0 %v273, 113
      %v345 = vpop.permute.xlu0 %344
      %v346 = vrot.slane %v345, 2
      %vm348 = vcmask 394504
      %349 = vst.msk [vmem:[#allocation2 + $0x4] sm:$0x3] %vm348, %v346
      %350 = vrot.lane.b32.xlu0 %v273, 121
      %v351 = vpop.permute.xlu0 %350
      %v352 = vrot.slane %v351, 2
      %vm354 = vcmask 591304
      %355 = vst.msk [vmem:[#allocation2 + $0x4] sm:$0x3] %vm354, %v352
      %356 = vrot.lane.b32.xlu0 %v273, 1
      %v357 = vpop.permute.xlu0 %356
      %v358 = vrot.slane %v357, 2
      %vm359 = vcmask 7168
      %v360 = vsel %vm359, %v357, %v358
      %vm362 = vcmask 788104
      %363 = vst.msk [vmem:[#allocation2 + $0x4] sm:$0x3] %vm362, %v360
      %364 = vrot.lane.b32.xlu0 %v273, 9
      %v365 = vpop.permute.xlu0 %364
      %v366 = vrot.slane %v365, 2
      %vm367 = vcmask 72704
      %v368 = vsel %vm367, %v365, %v366
      %vm370 = vcmask 984904
      %371 = vst.msk [vmem:[#allocation2 + $0x4] sm:$0x3] %vm370, %v368
      %372 = vrot.lane.b32.xlu0 %v273, 17
      %v373 = vpop.permute.xlu0 %372
      %v374 = vrot.slane %v373, 2
      %vm376 = vcmask 132104
      %377 = vst.msk [vmem:[#allocation2 + $0x6] sm:$0x3] %vm376, %v374
      %v378 = vld [vmem:[#allocation2] sm:$0x3f]
      %v379 = vld [vmem:[#allocation2] sm:$0xff]
      %381 = vst [vmem:[#allocation1] ss:$4 sm:$0xff] %v378
      %v382 = vld.sshfl [vmem:[#allocation1] sm:$0xff pattern:$0x73625140]
      %v383 = vld.sshfl [vmem:[#allocation1 + $0x8] sm:$0xff pattern:$0x73625140]
      %v384 = vld.sshfl [vmem:[#allocation1 + $0x10] sm:$0xff pattern:$0x73625140]
      %s386 = scalar_lea.vmem [#allocation1], 1
      %387 = vst [vmem:[%s386] ss:$4 sm:$0xff] %v379
      %v388 = vld.sshfl [vmem:[#allocation1] sm:$0xff pattern:$0x73625140]
      %v390 = vld.sshfl [vmem:[#allocation1 + $0x8] sm:$0xff pattern:$0x73625140]
      %v392 = vld.sshfl [vmem:[#allocation1 + $0x10] sm:$0xff pattern:$0x73625140]
      %v394 = vld.sshfl [vmem:[#allocation1 + $0x18] sm:$0xff pattern:$0x73625140]
      %396 = vrot.lane.b32.xlu0 %v388, 127
      %v397 = vpop.permute.xlu0 %396
      %398 = vrot.lane.b32.xlu0 %v390, 127
      %v399 = vpop.permute.xlu0 %398
      %400 = vrot.lane.b32.xlu0 %v392, 127
      %v401 = vpop.permute.xlu0 %400
      %402 = vrot.lane.b32.xlu0 %v394, 127
      %v403 = vpop.permute.xlu0 %402
      %vm404 = vcmask 1039360
      %v405 = vsel %vm404, %v397, %v399
      %v406 = vsel %vm404, %v399, %v401
      %v407 = vsel %vm404, %v401, %v403
      %s408 = scalar_lea.vmem [#allocation1], 2
      %409 = vst [vmem:[%s408] ss:$4 sm:$0xff] %v379
      %v410 = vld.sshfl [vmem:[#allocation1] sm:$0xff pattern:$0x73625140]
      %v412 = vld.sshfl [vmem:[#allocation1 + $0x8] sm:$0xff pattern:$0x73625140]
      %v414 = vld.sshfl [vmem:[#allocation1 + $0x10] sm:$0xff pattern:$0x73625140]
      %v416 = vld.sshfl [vmem:[#allocation1 + $0x18] sm:$0xff pattern:$0x73625140]
      %418 = vrot.lane.b32.xlu0 %v410, 126
      %v419 = vpop.permute.xlu0 %418
      %420 = vrot.lane.b32.xlu0 %v412, 126
      %v421 = vpop.permute.xlu0 %420
      %422 = vrot.lane.b32.xlu0 %v414, 126
      %v423 = vpop.permute.xlu0 %422
      %424 = vrot.lane.b32.xlu0 %v416, 126
      %v425 = vpop.permute.xlu0 %424
      %vm426 = vcmask 1031168
      %v427 = vsel %vm426, %v419, %v421
      %v428 = vsel %vm426, %v421, %v423
      %v429 = vsel %vm426, %v423, %v425
      %s430 = scalar_lea.vmem [#allocation1], 3
      %431 = vst [vmem:[%s430] ss:$4 sm:$0xff] %v379
      %v432 = vld.sshfl [vmem:[#allocation1] sm:$0xff pattern:$0x73625140]
      %v434 = vld.sshfl [vmem:[#allocation1 + $0x8] sm:$0xff pattern:$0x73625140]
      %v436 = vld.sshfl [vmem:[#allocation1 + $0x10] sm:$0xff pattern:$0x73625140]
      %v438 = vld.sshfl [vmem:[#allocation1 + $0x18] sm:$0xff pattern:$0x73625140]
      %440 = vrot.lane.b32.xlu0 %v432, 104
      %v441 = vpop.permute.xlu0 %440
      %442 = vrot.lane.b32.xlu0 %v434, 104
      %v443 = vpop.permute.xlu0 %442
      %444 = vrot.lane.b32.xlu0 %v436, 104
      %v445 = vpop.permute.xlu0 %444
      %446 = vrot.lane.b32.xlu0 %v438, 104
      %v447 = vpop.permute.xlu0 %446
      %vm448 = vcmask 850944
      %v449 = vsel %vm448, %v441, %v443
      %v450 = vsel %vm448, %v443, %v445
      %v451 = vsel %vm448, %v445, %v447
      %452 = vst [vmem:[#allocation1] ss:$4 sm:$0xff] %v379
      %v453 = vld.sshfl [vmem:[#allocation1] sm:$0xff pattern:$0x73625140]
      %v455 = vld.sshfl [vmem:[#allocation1 + $0x8] sm:$0xff pattern:$0x73625140]
      %v457 = vld.sshfl [vmem:[#allocation1 + $0x10] sm:$0xff pattern:$0x73625140]
      %v459 = vld.sshfl [vmem:[#allocation1 + $0x18] sm:$0xff pattern:$0x73625140]
      %461 = vrot.lane.b32.xlu0 %v453, 103
      %v462 = vpop.permute.xlu0 %461
      %463 = vrot.lane.b32.xlu0 %v455, 103
      %v464 = vpop.permute.xlu0 %463
      %465 = vrot.lane.b32.xlu0 %v457, 103
      %v466 = vpop.permute.xlu0 %465
      %467 = vrot.lane.b32.xlu0 %v459, 103
      %v468 = vpop.permute.xlu0 %467
      %vm469 = vcmask 842752
      %v470 = vsel %vm469, %v462, %v464
      %v471 = vsel %vm469, %v464, %v466
      %v472 = vsel %vm469, %v466, %v468
      %s473 = scalar_lea.vmem [#allocation1], 1
      %474 = vst [vmem:[%s473] ss:$4 sm:$0xff] %v379
      %v475 = vld.sshfl [vmem:[#allocation1] sm:$0xff pattern:$0x73625140]
      %v477 = vld.sshfl [vmem:[#allocation1 + $0x8] sm:$0xff pattern:$0x73625140]
      %v479 = vld.sshfl [vmem:[#allocation1 + $0x10] sm:$0xff pattern:$0x73625140]
      %v481 = vld.sshfl [vmem:[#allocation1 + $0x18] sm:$0xff pattern:$0x73625140]
      %483 = vrot.lane.b32.xlu0 %v475, 102
      %v484 = vpop.permute.xlu0 %483
      %485 = vrot.lane.b32.xlu0 %v477, 102
      %v486 = vpop.permute.xlu0 %485
      %487 = vrot.lane.b32.xlu0 %v479, 102
      %v488 = vpop.permute.xlu0 %487
      %489 = vrot.lane.b32.xlu0 %v481, 102
      %v490 = vpop.permute.xlu0 %489
      %vm491 = vcmask 834560
      %v492 = vsel %vm491, %v484, %v486
      %v493 = vsel %vm491, %v486, %v488
      %v494 = vsel %vm491, %v488, %v490
      %s495 = scalar_lea.vmem [#allocation1], 2
      %496 = vst [vmem:[%s495] ss:$4 sm:$0xff] %v379
      %v497 = vld.sshfl [vmem:[#allocation1] sm:$0xff pattern:$0x73625140]
      %v499 = vld.sshfl [vmem:[#allocation1 + $0x8] sm:$0xff pattern:$0x73625140]
      %v501 = vld.sshfl [vmem:[#allocation1 + $0x10] sm:$0xff pattern:$0x73625140]
      %v503 = vld.sshfl [vmem:[#allocation1 + $0x18] sm:$0xff pattern:$0x73625140]
      %505 = vrot.lane.b32.xlu0 %v497, 80
      %v506 = vpop.permute.xlu0 %505
      %507 = vrot.lane.b32.xlu0 %v499, 80
      %v508 = vpop.permute.xlu0 %507
      %509 = vrot.lane.b32.xlu0 %v501, 80
      %v510 = vpop.permute.xlu0 %509
      %511 = vrot.lane.b32.xlu0 %v503, 80
      %v512 = vpop.permute.xlu0 %511
      %vm513 = vcmask 654336
      %v514 = vsel %vm513, %v506, %v508
      %v515 = vsel %vm513, %v508, %v510
      %v516 = vsel %vm513, %v510, %v512
      %s517 = scalar_lea.vmem [#allocation1], 3
      %518 = vst [vmem:[%s517] ss:$4 sm:$0xff] %v379
      %v519 = vld.sshfl [vmem:[#allocation1] sm:$0xff pattern:$0x73625140]
      %v521 = vld.sshfl [vmem:[#allocation1 + $0x8] sm:$0xff pattern:$0x73625140]
      %v523 = vld.sshfl [vmem:[#allocation1 + $0x10] sm:$0xff pattern:$0x73625140]
      %v525 = vld.sshfl [vmem:[#allocation1 + $0x18] sm:$0xff pattern:$0x73625140]
      %527 = vrot.lane.b32.xlu0 %v519, 79
      %v528 = vpop.permute.xlu0 %527
      %529 = vrot.lane.b32.xlu0 %v521, 79
      %v530 = vpop.permute.xlu0 %529
      %531 = vrot.lane.b32.xlu0 %v523, 79
      %v532 = vpop.permute.xlu0 %531
      %533 = vrot.lane.b32.xlu0 %v525, 79
      %v534 = vpop.permute.xlu0 %533
      %vm535 = vcmask 646144
      %v536 = vsel %vm535, %v528, %v530
      %v537 = vsel %vm535, %v530, %v532
      %v538 = vsel %vm535, %v532, %v534
      %539 = vst [vmem:[#allocation1] ss:$4 sm:$0xff] %v379
      %v540 = vld.sshfl [vmem:[#allocation1] sm:$0xff pattern:$0x73625140]
      %v542 = vld.sshfl [vmem:[#allocation1 + $0x8] sm:$0xff pattern:$0x73625140]
      %v544 = vld.sshfl [vmem:[#allocation1 + $0x10] sm:$0xff pattern:$0x73625140]
      %v546 = vld.sshfl [vmem:[#allocation1 + $0x18] sm:$0xff pattern:$0x73625140]
      %548 = vrot.lane.b32.xlu0 %v540, 78
      %v549 = vpop.permute.xlu0 %548
      %550 = vrot.lane.b32.xlu0 %v542, 78
      %v551 = vpop.permute.xlu0 %550
      %552 = vrot.lane.b32.xlu0 %v544, 78
      %v553 = vpop.permute.xlu0 %552
      %554 = vrot.lane.b32.xlu0 %v546, 78
      %v555 = vpop.permute.xlu0 %554
      %vm556 = vcmask 637952
      %v557 = vsel %vm556, %v549, %v551
      %v558 = vsel %vm556, %v551, %v553
      %v559 = vsel %vm556, %v553, %v555
      %v561 = vsel %vm253, %v382, %v405
      %v563 = vsel %vm253, %v383, %v406
      %v565 = vsel %vm253, %v384, %v407
      %vm566 = vcmask 1043456
      %v568 = vsel %vm566, %v561, %v427
      %v570 = vsel %vm566, %v563, %v428
      %v572 = vsel %vm566, %v565, %v429
      %vm573 = vcmask 1045504
      %v575 = vsel %vm573, %v568, %v449
      %v578 = vsel %vm573, %v570, %v450
      %v581 = vsel %vm573, %v572, %v451
      %v585 = vsel %vm253, %v470, %v492
      %v588 = vsel %vm253, %v471, %v493
      %v591 = vsel %vm253, %v472, %v494
      %v593 = vsel %vm566, %v585, %v514
      %v595 = vsel %vm566, %v588, %v515
      %v597 = vsel %vm566, %v591, %v516
      %v599 = vsel %vm573, %v593, %v536
      %v602 = vsel %vm573, %v595, %v537
      %v605 = vsel %vm573, %v597, %v538
      %v607 = vld [vmem:[%s1] sm:$0xf]
      %v608 = vld [vmem:[%s2] sm:$0xff]
      %610 = vset.pattern.permute.xlu0 0
      %611 = vperm.xlu0 %610, %v608
      %v612 = vpop.permute.xlu0 %611
      %vm614 = vcmask 293888
      %v616 = vsel %vm614, %v607, 0
      %v619 = vsel %vm253, %v557, 0
      %v622 = vsel %vm253, %v558, 0
      %v625 = vsel %vm253, %v559, 0
      %627 = vmatpush.bf16.msra.mxu0 0
      %628 = vmatpush.bf16.msra.mxu0 0
      %629 = vmatpush.bf16.msra.mxu0 0
      %630 = vmatpush.bf16.msra.mxu0 0
      %631 = vmatpush.bf16.msra.mxu0 0
      %632 = vmatpush.bf16.msra.mxu0 %v619
      %633 = vmatpush.bf16.msra.mxu0 %v599
      %634 = vmatpush.bf16.msra.mxu0 %v575
      %635 = vmatmul.bf16.gmra.mxu0 %v616
      %v636 = vpop.f32.mrf.mxu0
      %v637 = vadd.f32 %v612, %v636
      %v638 = vpop.f32.mrf.mxu0
      %639 = vdwg.mxu0
      %640 = vmatpush.bf16.msra.mxu0 0
      %641 = vmatpush.bf16.msra.mxu0 0
      %642 = vmatpush.bf16.msra.mxu0 0
      %643 = vmatpush.bf16.msra.mxu0 0
      %644 = vmatpush.bf16.msra.mxu0 0
      %645 = vmatpush.bf16.msra.mxu0 %v622
      %646 = vmatpush.bf16.msra.mxu0 %v602
      %647 = vmatpush.bf16.msra.mxu0 %v578
      %648 = vmatmul.bf16.gmra.mxu0 %v616
      %v649 = vpop.f32.mrf.mxu0
      %v650 = vadd.f32 %v612, %v649
      %v651 = vpop.f32.mrf.mxu0
      %652 = vdwg.mxu0
      %653 = vmatpush.bf16.msra.mxu0 0
      %654 = vmatpush.bf16.msra.mxu0 0
      %655 = vmatpush.bf16.msra.mxu0 0
      %656 = vmatpush.bf16.msra.mxu0 0
      %657 = vmatpush.bf16.msra.mxu0 0
      %658 = vmatpush.bf16.msra.mxu0 %v625
      %659 = vmatpush.bf16.msra.mxu0 %v605
      %660 = vmatpush.bf16.msra.mxu0 %v581
      %661 = vmatmul.bf16.gmra.mxu0 %v616
      %v662 = vpop.f32.mrf.mxu0
      %v663 = vadd.f32 %v612, %v662
      %v664 = vpop.f32.mrf.mxu0
      %665 = vdwg.mxu0
      %vm666 = vcmp.gt.f32.partialorder %v637, 0.0
      %vm667 = vcmp.gt.f32.partialorder %v650, 0.0
      %vm668 = vcmp.gt.f32.partialorder %v663, 0.0
      %v669 = vmul.f32 %v637, 0.2
      %v670 = vmul.f32 %v650, 0.2
      %v671 = vmul.f32 %v663, 0.2
      %v672 = vsel %vm666, %v637, %v669
      %v673 = vsel %vm667, %v650, %v670
      %v674 = vsel %vm668, %v663, %v671
      %v675 = vmul.f32 %v672, %v672
      %v676 = vmul.f32 %v673, %v673
      %v677 = vmul.f32 %v674, %v674
      %v678 = vrot.slane %v675, 4
      %v679 = vadd.f32 %v675, %v678
      %v680 = vrot.slane %v679, 2
      %v681 = vadd.f32 %v679, %v680
      %v682 = vrot.slane %v681, 1
      %v683 = vadd.f32 %v681, %v682
      %v684 = vrot.slane %v676, 4
      %v685 = vadd.f32 %v676, %v684
      %v686 = vrot.slane %v685, 2
      %v687 = vadd.f32 %v685, %v686
      %v688 = vrot.slane %v687, 1
      %v689 = vadd.f32 %v687, %v688
      %v690 = vrot.slane %v677, 4
      %v691 = vadd.f32 %v677, %v690
      %v692 = vrot.slane %v691, 2
      %v693 = vadd.f32 %v691, %v692
      %v694 = vrot.slane %v693, 1
      %v695 = vadd.f32 %v693, %v694
      %v696 = vrcp.pop 8.0
      %v697 = vmul.f32 8.0, %v696
      %v698 = vsub.f32 1.0, %v697
      %v699 = vmul.f32 %v696, %v698
      %v700 = vadd.f32 %v696, %v699
      %vm701 = vweird.f32 %v696
      %v702 = vsel %vm701, %v696, %v700
      %v703 = vmul.f32 %v683, %v702
      %v704 = vmul.f32 %v689, %v702
      %v705 = vmul.f32 %v695, %v702
      %v706 = vadd.f32 %v703, 1e-08
      %v707 = vadd.f32 %v704, 1e-08
      %v708 = vadd.f32 %v705, 1e-08
      %v709 = vrsqrt.pop %v706
      %v710 = vmul.f32 %v709, %v706
      %v711 = vmul.f32 %v710, %v709
      %v712 = vmul.f32 0.5, %v711
      %v713 = vsub.f32 1.5, %v712
      %v714 = vmul.f32 %v709, %v713
      %vm715 = vweird.f32 %v706
      %vm716 = vweird.f32 %v709
      %vm717 = vmor %vm715, %vm716
      %v718 = vsel %vm717, %v709, %v714
      %v719 = vrsqrt.pop %v707
      %v720 = vmul.f32 %v719, %v707
      %v721 = vmul.f32 %v720, %v719
      %v722 = vmul.f32 0.5, %v721
      %v723 = vsub.f32 1.5, %v722
      %v724 = vmul.f32 %v719, %v723
      %vm725 = vweird.f32 %v707
      %vm726 = vweird.f32 %v719
      %vm727 = vmor %vm725, %vm726
      %v728 = vsel %vm727, %v719, %v724
      %v729 = vrsqrt.pop %v708
      %v730 = vmul.f32 %v729, %v708
      %v731 = vmul.f32 %v730, %v729
      %v732 = vmul.f32 0.5, %v731
      %v733 = vsub.f32 1.5, %v732
      %v734 = vmul.f32 %v729, %v733
      %vm735 = vweird.f32 %v708
      %vm736 = vweird.f32 %v729
      %vm737 = vmor %vm735, %vm736
      %v738 = vsel %vm737, %v729, %v734
      %v739 = vmul.f32 %v672, %v718
      %v740 = vmul.f32 %v673, %v728
      %v741 = vmul.f32 %v674, %v738
      %vm742 = vcmask 199680
      %743 = vst.msk [vmem:[#allocation3] sm:$0xf] %vm742, 0
      %vm744 = vcmask 584904
      %745 = vst.msk [vmem:[#allocation3 + $0xc] sm:$0xf] %vm744, 0
      %v746 = vld [vmem:[%s5] sm:$0x7]
      %v748 = vperm.slane %v746, 0
      %v749 = vperm.slane %v746, 1
      %v750 = vperm.slane %v746, 2
      %v754 = vmul.f32 %v739, %v748
      %v755 = vmul.f32 %v740, %v749
      %v756 = vmul.f32 %v741, %v750
      %v757 = vpack.c.bf16 %v755, %v754
      %v758 = vpack.c.bf16 %v756, %v756
      %761 = vrot.lane.b32.xlu0 %v757, 25
      %v762 = vpop.permute.xlu0 %761
      %763 = vrot.lane.b32.xlu0 %v758, 25
      %v764 = vpop.permute.xlu0 %763
      %v765 = vrot.slane %v762, 4
      %v766 = vrot.slane %v764, 4
      %vm767 = vcmask 203776
      %v768 = vsel %vm767, %v765, %v762
      %vm769 = vcmask 1043456
      %v770 = vsel %vm769, %v765, %v766
      %v771 = vsel %vm767, %v770, %v764
      %vm774 = vcmask 1043656
      %vm775 = vcmask 1047556
      %vm776 = vmor %vm775, %vm774
      %777 = vst.msk [vmem:[#allocation3] sm:$0xff] %vm776, %v768
      %vm778 = vcmask 203780
      %vm779 = vmor %vm778, %vm566
      %780 = vst.msk [vmem:[#allocation3 + $0x8] sm:$0xff] %vm779, %v771
      %v781 = vld [vmem:[#allocation3] sm:$0xff]
      %v782 = vld [vmem:[#allocation3 + $0x8] sm:$0xf]
      %v783 = vld [vmem:[#allocation3 + $0x8] sm:$0xff]
      %v786 = vunpack.c.l.b16 %v781
      %v787 = vunpack.c.h.b16 %v781
      %v788 = vunpack.c.l.b16 %v782
      %v789 = vpack.c.b16 %v786, %v786
      %v790 = vpack.c.b16 %v787, %v787
      %v791 = vpack.c.b16 %v788, %v788
      %v793 = vunpack.c.l.b16 %v783
      %v794 = vunpack.c.h.b16 %v783
      %v795 = vpack.c.b16 %v793, %v793
      %v796 = vpack.c.b16 %v794, %v794
      %797 = vrot.lane.b32.xlu0 %v789, 127
      %v798 = vpop.permute.xlu0 %797
      %799 = vrot.lane.b32.xlu0 %v790, 127
      %v800 = vpop.permute.xlu0 %799
      %801 = vrot.lane.b32.xlu0 %v795, 127
      %v802 = vpop.permute.xlu0 %801
      %803 = vrot.lane.b32.xlu0 %v796, 127
      %v804 = vpop.permute.xlu0 %803
      %v805 = vsel %vm404, %v798, %v800
      %v806 = vsel %vm404, %v800, %v802
      %v807 = vsel %vm404, %v802, %v804
      %808 = vrot.lane.b32.xlu0 %v789, 126
      %v809 = vpop.permute.xlu0 %808
      %810 = vrot.lane.b32.xlu0 %v790, 126
      %v811 = vpop.permute.xlu0 %810
      %812 = vrot.lane.b32.xlu0 %v795, 126
      %v813 = vpop.permute.xlu0 %812
      %814 = vrot.lane.b32.xlu0 %v796, 126
      %v815 = vpop.permute.xlu0 %814
      %v816 = vsel %vm426, %v809, %v811
      %v817 = vsel %vm426, %v811, %v813
      %v818 = vsel %vm426, %v813, %v815
      %819 = vrot.lane.b32.xlu0 %v789, 104
      %v820 = vpop.permute.xlu0 %819
      %821 = vrot.lane.b32.xlu0 %v790, 104
      %v822 = vpop.permute.xlu0 %821
      %823 = vrot.lane.b32.xlu0 %v795, 104
      %v824 = vpop.permute.xlu0 %823
      %825 = vrot.lane.b32.xlu0 %v796, 104
      %v826 = vpop.permute.xlu0 %825
      %v827 = vsel %vm448, %v820, %v822
      %v828 = vsel %vm448, %v822, %v824
      %v829 = vsel %vm448, %v824, %v826
      %830 = vrot.lane.b32.xlu0 %v789, 103
      %v831 = vpop.permute.xlu0 %830
      %832 = vrot.lane.b32.xlu0 %v790, 103
      %v833 = vpop.permute.xlu0 %832
      %834 = vrot.lane.b32.xlu0 %v795, 103
      %v835 = vpop.permute.xlu0 %834
      %836 = vrot.lane.b32.xlu0 %v796, 103
      %v837 = vpop.permute.xlu0 %836
      %v838 = vsel %vm469, %v831, %v833
      %v839 = vsel %vm469, %v833, %v835
      %v840 = vsel %vm469, %v835, %v837
      %841 = vrot.lane.b32.xlu0 %v789, 102
      %v842 = vpop.permute.xlu0 %841
      %843 = vrot.lane.b32.xlu0 %v790, 102
      %v844 = vpop.permute.xlu0 %843
      %845 = vrot.lane.b32.xlu0 %v795, 102
      %v846 = vpop.permute.xlu0 %845
      %847 = vrot.lane.b32.xlu0 %v796, 102
      %v848 = vpop.permute.xlu0 %847
      %v849 = vsel %vm491, %v842, %v844
      %v850 = vsel %vm491, %v844, %v846
      %v851 = vsel %vm491, %v846, %v848
      %852 = vrot.lane.b32.xlu0 %v789, 80
      %v853 = vpop.permute.xlu0 %852
      %854 = vrot.lane.b32.xlu0 %v790, 80
      %v855 = vpop.permute.xlu0 %854
      %856 = vrot.lane.b32.xlu0 %v795, 80
      %v857 = vpop.permute.xlu0 %856
      %858 = vrot.lane.b32.xlu0 %v796, 80
      %v859 = vpop.permute.xlu0 %858
      %v860 = vsel %vm513, %v853, %v855
      %v861 = vsel %vm513, %v855, %v857
      %v862 = vsel %vm513, %v857, %v859
      %863 = vrot.lane.b32.xlu0 %v789, 79
      %v864 = vpop.permute.xlu0 %863
      %865 = vrot.lane.b32.xlu0 %v790, 79
      %v866 = vpop.permute.xlu0 %865
      %867 = vrot.lane.b32.xlu0 %v795, 79
      %v868 = vpop.permute.xlu0 %867
      %869 = vrot.lane.b32.xlu0 %v796, 79
      %v870 = vpop.permute.xlu0 %869
      %v871 = vsel %vm535, %v864, %v866
      %v872 = vsel %vm535, %v866, %v868
      %v873 = vsel %vm535, %v868, %v870
      %874 = vrot.lane.b32.xlu0 %v789, 78
      %v875 = vpop.permute.xlu0 %874
      %876 = vrot.lane.b32.xlu0 %v790, 78
      %v877 = vpop.permute.xlu0 %876
      %878 = vrot.lane.b32.xlu0 %v795, 78
      %v879 = vpop.permute.xlu0 %878
      %880 = vrot.lane.b32.xlu0 %v796, 78
      %v881 = vpop.permute.xlu0 %880
      %v882 = vsel %vm556, %v875, %v877
      %v883 = vsel %vm556, %v877, %v879
      %v884 = vsel %vm556, %v879, %v881
      %v887 = vsel %vm566, %v789, %v805
      %v891 = vsel %vm566, %v790, %v806
      %v895 = vsel %vm566, %v791, %v807
      %v899 = vsel %vm566, %v816, %v827
      %v903 = vsel %vm566, %v817, %v828
      %v907 = vsel %vm566, %v818, %v829
      %v911 = vsel %vm566, %v838, %v849
      %v915 = vsel %vm566, %v839, %v850
      %v919 = vsel %vm566, %v840, %v851
      %v923 = vsel %vm566, %v860, %v871
      %v927 = vsel %vm566, %v861, %v872
      %v931 = vsel %vm566, %v862, %v873
      %v933 = vld [vmem:[%s3] sm:$0xf]
      %v934 = vld [vmem:[%s4] sm:$0xff]
      %936 = vset.pattern.permute.xlu0 0
      %937 = vperm.xlu0 %936, %v934
      %v938 = vpop.permute.xlu0 %937
      %vm940 = vcmask 588800
      %v942 = vsel %vm940, %v933, 0
      %v945 = vsel %vm566, %v882, 0
      %v948 = vsel %vm566, %v883, 0
      %v951 = vsel %vm566, %v884, 0
      %953 = vmatpush.bf16.msra.mxu0 0
      %954 = vmatpush.bf16.msra.mxu0 0
      %955 = vmatpush.bf16.msra.mxu0 0
      %956 = vmatpush.bf16.msra.mxu0 %v945
      %957 = vmatpush.bf16.msra.mxu0 %v923
      %958 = vmatpush.bf16.msra.mxu0 %v911
      %959 = vmatpush.bf16.msra.mxu0 %v899
      %960 = vmatpush.bf16.msra.mxu0 %v887
      %961 = vmatmul.bf16.gmra.mxu0 %v942
      %v962 = vpop.f32.mrf.mxu0
      %v963 = vadd.f32 %v938, %v962
      %v964 = vpop.f32.mrf.mxu0
      %965 = vdwg.mxu0
      %966 = vmatpush.bf16.msra.mxu0 0
      %967 = vmatpush.bf16.msra.mxu0 0
      %968 = vmatpush.bf16.msra.mxu0 0
      %969 = vmatpush.bf16.msra.mxu0 %v948
      %970 = vmatpush.bf16.msra.mxu0 %v927
      %971 = vmatpush.bf16.msra.mxu0 %v915
      %972 = vmatpush.bf16.msra.mxu0 %v903
      %973 = vmatpush.bf16.msra.mxu0 %v891
      %974 = vmatmul.bf16.gmra.mxu0 %v942
      %v975 = vpop.f32.mrf.mxu0
      %v976 = vadd.f32 %v938, %v975
      %v977 = vpop.f32.mrf.mxu0
      %978 = vdwg.mxu0
      %979 = vmatpush.bf16.msra.mxu0 0
      %980 = vmatpush.bf16.msra.mxu0 0
      %981 = vmatpush.bf16.msra.mxu0 0
      %982 = vmatpush.bf16.msra.mxu0 %v951
      %983 = vmatpush.bf16.msra.mxu0 %v931
      %984 = vmatpush.bf16.msra.mxu0 %v919
      %985 = vmatpush.bf16.msra.mxu0 %v907
      %986 = vmatpush.bf16.msra.mxu0 %v895
      %987 = vmatmul.bf16.gmra.mxu0 %v942
      %v988 = vpop.f32.mrf.mxu0
      %v989 = vadd.f32 %v938, %v988
      %v990 = vpop.f32.mrf.mxu0
      %991 = vdwg.mxu0
      %vm992 = vcmp.gt.f32.partialorder %v963, 0.0
      %vm993 = vcmp.gt.f32.partialorder %v976, 0.0
      %vm994 = vcmp.gt.f32.partialorder %v989, 0.0
      %v995 = vmul.f32 %v963, 0.2
      %v996 = vmul.f32 %v976, 0.2
      %v997 = vmul.f32 %v989, 0.2
      %v998 = vsel %vm992, %v963, %v995
      %v999 = vsel %vm993, %v976, %v996
      %v1000 = vsel %vm994, %v989, %v997
      %v1001 = vmul.f32 %v998, %v998
      %v1002 = vmul.f32 %v999, %v999
      %v1003 = vmul.f32 %v1000, %v1000
      %v1004 = vrot.slane %v1001, 4
      %v1005 = vadd.f32 %v1001, %v1004
      %v1006 = vrot.slane %v1005, 2
      %v1007 = vadd.f32 %v1005, %v1006
      %v1008 = vrot.slane %v1007, 1
      %v1009 = vadd.f32 %v1007, %v1008
      %v1010 = vrot.slane %v1002, 4
      %v1011 = vadd.f32 %v1002, %v1010
      %v1012 = vrot.slane %v1011, 2
      %v1013 = vadd.f32 %v1011, %v1012
      %v1014 = vrot.slane %v1013, 1
      %v1015 = vadd.f32 %v1013, %v1014
      %v1016 = vrot.slane %v1003, 4
      %v1017 = vadd.f32 %v1003, %v1016
      %v1018 = vrot.slane %v1017, 2
      %v1019 = vadd.f32 %v1017, %v1018
      %v1020 = vrot.slane %v1019, 1
      %v1021 = vadd.f32 %v1019, %v1020
      %v1022 = vmul.f32 %v1009, %v702
      %v1023 = vmul.f32 %v1015, %v702
      %v1024 = vmul.f32 %v1021, %v702
      %v1025 = vadd.f32 %v1022, 1e-08
      %v1026 = vadd.f32 %v1023, 1e-08
      %v1027 = vadd.f32 %v1024, 1e-08
      %v1028 = vrsqrt.pop %v1025
      %v1029 = vmul.f32 %v1028, %v1025
      %v1030 = vmul.f32 %v1029, %v1028
      %v1031 = vmul.f32 0.5, %v1030
      %v1032 = vsub.f32 1.5, %v1031
      %v1033 = vmul.f32 %v1028, %v1032
      %vm1034 = vweird.f32 %v1025
      %vm1035 = vweird.f32 %v1028
      %vm1036 = vmor %vm1034, %vm1035
      %v1037 = vsel %vm1036, %v1028, %v1033
      %v1038 = vrsqrt.pop %v1026
      %v1039 = vmul.f32 %v1038, %v1026
      %v1040 = vmul.f32 %v1039, %v1038
      %v1041 = vmul.f32 0.5, %v1040
      %v1042 = vsub.f32 1.5, %v1041
      %v1043 = vmul.f32 %v1038, %v1042
      %vm1044 = vweird.f32 %v1026
      %vm1045 = vweird.f32 %v1038
      %vm1046 = vmor %vm1044, %vm1045
      %v1047 = vsel %vm1046, %v1038, %v1043
      %v1048 = vrsqrt.pop %v1027
      %v1049 = vmul.f32 %v1048, %v1027
      %v1050 = vmul.f32 %v1049, %v1048
      %v1051 = vmul.f32 0.5, %v1050
      %v1052 = vsub.f32 1.5, %v1051
      %v1053 = vmul.f32 %v1048, %v1052
      %vm1054 = vweird.f32 %v1027
      %vm1055 = vweird.f32 %v1048
      %vm1056 = vmor %vm1054, %vm1055
      %v1057 = vsel %vm1056, %v1048, %v1053
      %v1058 = vmul.f32 %v998, %v1037
      %v1059 = vmul.f32 %v999, %v1047
      %v1060 = vmul.f32 %v1000, %v1057
      %1061 = vst [vmem:[%s251] sm:$0xff] %v1058
      %1062 = vst [vmem:[%s251 + $0x8] sm:$0xff] %v1059
      %1063 = vst [vmem:[%s251 + $0x10] sm:$0xff] %v1060
      %p1064 = scmp.lt.s32.totalorder %s17, 1
      %s1065 = scalar_select %p1064, %s17, 1
      %s1066 = smul.addr %s1065, 3
      %s1067 = smul.addr %s1066, 8
      %s1068 = scalar_lea.vmem %s6, %s1067
      // Predicated region
      $region45: #{conv_block_forward.1} parent=43 // pred_check
        %p1069 = pneg %p166
      $region46: #{conv_block_forward.1} parent=43 // pred_check_branch
        %1071 = sbr.rel (%p1069) target = $region48
      $region47: #{conv_block_forward.1} parent=43 // pred_region
        _
      $region48: #{conv_block_forward.1} parent=43 // pred_fallthru
        _
    $region44: #{conv_block_forward.1} parent=5 // pred_fallthru
      _
    %p1072 = scmp.le.s32.totalorder 2, %s12
    // Predicated region
    $region49: #{conv_block_forward.1} parent=5 // pred_check
      %p1073 = pneg %p1072
    $region50: #{conv_block_forward.1} parent=5 // pred_check_branch
      %1075 = sbr.rel (%p1073) target = $region52
    $region51: #{conv_block_forward.1} parent=5 // pred_region
      %s1076 = ssub.s32 %s12, 2
      // Predicated region
      $region53: #{conv_block_forward.1} parent=51 // pred_check
        %p1077 = pneg %p172
      $region54: #{conv_block_forward.1} parent=51 // pred_check_branch
        %1079 = sbr.rel (%p1077) target = $region56
      $region55: #{conv_block_forward.1} parent=51 // pred_region
        %p1080 = scmp.lt.s32.totalorder %s18, 1
        %s1081 = scalar_select %p1080, %s18, 1
        %s1082 = smul.addr %s1081, 3
        %s1083 = smul.addr %s1082, 8
        %s1084 = scalar_lea.vmem %s6, %s1083
      $region56: #{conv_block_forward.1} parent=51 // pred_fallthru
        _
    $region52: #{conv_block_forward.1} parent=5 // pred_fallthru
      _
  $region6: #{conv_block_forward.1} parent=0 // loop_footer
    %s16 = sadd.s32 1, %s12
  $region7: #{conv_block_forward.1} parent=0 // loop_footer_branch
    %11 = sbr.rel target = $region3
  $region8: #{conv_block_forward.1} parent=0 // loop_exit
    _

</llo_original>
